<compile_context>
chip_gen: v6e
topology: v6e:2x2x1
jax: 0.10.0
libtpu: 0.0.40
codegen_flags: <defaults>
</compile_context>

<pallas_src>
from functools import partial

import jax
import jax.numpy as jnp
from jax.experimental import pallas as pl
from jax.experimental.pallas import tpu as pltpu


def _attn_agg_kernel(x_ref, c_ref, wq_ref, wkv_ref, wo_ref, out_ref,
                     *, n_heads, head_dim, scale, approx_recip):
    # x_ref:  (bt, n, d)  bf16      c_ref: (bt, nc, d) bf16
    # wq_ref: (d, d)      bf16      wkv_ref: (d, 2d) bf16 ([:, :d]=K, [:, d:]=V)
    # wo_ref: (n_heads, head_dim, d) bf16  (head-major row blocks of Wout^T)
    bt, n, d = x_ref.shape
    _, nc, _ = c_ref.shape

    # Fold the batch tile into M so the projections are the big MXU-friendly
    # matmuls (K = d, N = d / 2d).  Activations already arrive as bf16.
    x = x_ref[...].reshape(bt * n, d)
    c = c_ref[...].reshape(bt * nc, d)

    q = jnp.dot(c, wq_ref[...], preferred_element_type=jnp.float32)    # (bt*nc, d)
    kv = jnp.dot(x, wkv_ref[...], preferred_element_type=jnp.float32)  # (bt*n, 2d)

    # Fold the softmax scale into q once; keep bf16 copies for the MXU.
    q = (q * scale).astype(jnp.bfloat16).reshape(bt, nc, d)
    kv = kv.astype(jnp.bfloat16).reshape(bt, n, 2 * d)

    # f32 accumulator for the output projection: heads accumulate into it, so
    # there is no (bt, nc, d) scratch round-trip (saves a vst+vld pass + VMEM).
    res = jnp.zeros((bt * nc, d), dtype=jnp.float32)

    for h in range(n_heads):                          # static, unrolled (small)
        lo = h * head_dim
        qh = q[:, :, lo:lo + head_dim]                # (bt, nc, hd)
        kh = kv[:, :, lo:lo + head_dim]               # (bt, n, hd)
        vh = kv[:, :, d + lo:d + lo + head_dim]       # (bt, n, hd)

        # Contract the last dims of both operands -> transposed-RHS matmul,
        # no explicit k transpose.
        s = jnp.einsum('bqe,bke->bqk', qh, kh,
                       preferred_element_type=jnp.float32)             # (bt, nc, n)
        s = s - jnp.max(s, axis=-1, keepdims=True)                     # stable softmax
        p = jnp.exp(s)
        denom = jnp.sum(p, axis=-1, keepdims=True)
        if approx_recip:
            p = p * pl.reciprocal(denom, approx=True)                  # EUP slot, ~free
        else:
            p = p / denom

        oh = jnp.einsum('bqk,bke->bqe', p.astype(jnp.bfloat16), vh,
                        preferred_element_type=jnp.float32)            # (bt, nc, hd)

        # Fold this head straight into the output projection:
        #   out = concat_h(o_h) @ Wo^T  ==  sum_h  o_h @ Wo^T[h*hd:(h+1)*hd, :]
        res = res + jnp.dot(oh.astype(jnp.bfloat16).reshape(bt * nc, head_dim),
                            wo_ref[h], preferred_element_type=jnp.float32)

    out_ref[...] = res.reshape(bt, nc, d).astype(out_ref.dtype)


def prepare_attention_aggregate_params(wq, wkv, wo, *, head_dim=32):
    """One-time weight prep (hoist out of the per-call path; cache with params).

    PyTorch Linear convention: W is [out_features, in_features].  Returns
    (Wq^T, Wkv^T, Wo^T split into head-major (h, hd, d) row blocks), all bf16.
    """
    d = wq.shape[1]
    assert d % head_dim == 0, "emb_dim must be divisible by head_dim"
    n_heads = d // head_dim
    wq_t = jnp.asarray(wq).T.astype(jnp.bfloat16)            # (d, d)
    wkv_t = jnp.asarray(wkv).T.astype(jnp.bfloat16)          # (d, 2d): [:, :d]=K, [:, d:]=V
    wo_t = jnp.asarray(wo).T.astype(jnp.bfloat16)            # (d, d)
    wo_h = wo_t.reshape(n_heads, head_dim, d)                # (h, hd, d)
    return wq_t, wkv_t, wo_h


def _est_vmem_bytes(bt, n, nc, d, out_itemsize):
    """Rough per-grid-step VMEM working set (bytes) for the tile heuristic."""
    act = 2 * bt * (n * d * 2 + nc * d * 2 + nc * d * out_itemsize)  # dbl-buffered blocks
    weights = (d * d + d * 2 * d + d * d) * 2                        # bf16, single-buffered
    inter = bt * (nc * d + n * 2 * d) * (4 + 2)                      # q/kv f32 + bf16 copies
    inter += bt * nc * n * 4 * 2 + bt * nc * d * 4                   # scores/probs + accumulator
    return act + weights + inter


def attention_aggregate(x, clusters, params, *, head_dim=32, batch_tile=None,
                        out_dtype=None, approx_softmax_recip=True):
    """x: [b, n, d], clusters: [b, nc, d], params from prepare_attention_aggregate_params.

    Returns (clusters_out [b, nc, d], None) — the assignment=None path of the module.
    """
    wq_t, wkv_t, wo_h = params
    b, n, d = x.shape
    _, nc, _ = clusters.shape
    assert d % head_dim == 0, "emb_dim must be divisible by head_dim"
    n_heads = d // head_dim
    assert wo_h.shape == (n_heads, head_dim, d)
    scale = float(head_dim ** -0.5)
    out_dtype = x.dtype if out_dtype is None else out_dtype
    out_itemsize = jnp.dtype(out_dtype).itemsize

    if batch_tile is None:
        # Largest batch tile whose working set fits the budget: 1 grid step
        # when the whole batch fits (single-TC v5e/v6e sweet spot, max M for
        # the MXU); otherwise prefer >= 4 steps over exactly 2 (worst
        # pipelining depth) when a deeper split exists.
        budget = 28 * 1024 * 1024
        divisors = [t for t in range(1, b + 1) if b % t == 0]
        fitting = [t for t in divisors
                   if _est_vmem_bytes(t, n, nc, d, out_itemsize) <= budget]
        batch_tile = max(fitting) if fitting else 1
        if b // batch_tile == 2:
            deeper = [t for t in fitting if b // t >= 4]
            if deeper:
                batch_tile = max(deeper)
    assert b % batch_tile == 0
    num_tiles = b // batch_tile

    vmem_limit = int(min(max(2 * _est_vmem_bytes(batch_tile, n, nc, d, out_itemsize),
                             32 * 1024 * 1024), 48 * 1024 * 1024))

    # bf16 activation I/O: halves HBM traffic and the double-buffered tile VMEM.
    x_bf = x.astype(jnp.bfloat16)
    c_bf = clusters.astype(jnp.bfloat16)

    kernel = partial(_attn_agg_kernel, n_heads=n_heads, head_dim=head_dim,
                     scale=scale, approx_recip=approx_softmax_recip)

    # Advisory cost estimate for XLA's scheduler.
    flops = (2 * b * nc * d * d            # q projection
             + 2 * b * n * d * (2 * d)     # fused kv projection
             + 4 * b * nc * n * d          # scores + p@v over all heads
             + 2 * b * nc * d * d)         # output projection
    transcendentals = b * n_heads * nc * (n + 1)   # exp + reciprocal
    bytes_accessed = ((x_bf.size + c_bf.size) * 2 + b * nc * d * out_itemsize
                      + (wq_t.size + wkv_t.size + wo_h.size) * 2)

    def _const_spec(shape):
        zeros = (0,) * len(shape)
        # Constant across the grid -> single-buffer to save VMEM.
        return pl.BlockSpec(shape, lambda i: zeros, pipeline_mode=pl.Buffered(1))

    out = pl.pallas_call(
        kernel,
        out_shape=jax.ShapeDtypeStruct((b, nc, d), out_dtype),
        grid=(num_tiles,),
        in_specs=[
            pl.BlockSpec((batch_tile, n, d), lambda i: (i, 0, 0)),    # x tile (bf16)
            pl.BlockSpec((batch_tile, nc, d), lambda i: (i, 0, 0)),   # clusters tile (bf16)
            _const_spec((d, d)),                                      # Wq^T
            _const_spec((d, 2 * d)),                                  # Wkv^T fused
            _const_spec((n_heads, head_dim, d)),                      # Wout^T head blocks
        ],
        out_specs=pl.BlockSpec((batch_tile, nc, d), lambda i: (i, 0, 0)),
        compiler_params=pltpu.CompilerParams(
            dimension_semantics=("parallel",),
            vmem_limit_bytes=vmem_limit),
        cost_estimate=pl.CostEstimate(
            flops=flops, transcendentals=transcendentals,
            bytes_accessed=bytes_accessed),
    )(x_bf, c_bf, wq_t, wkv_t, wo_h)

    return out, None


def _reference(x, clusters, wq, wkv, wo, *, head_dim=32):
    b, n, d = x.shape
    nc = clusters.shape[1]
    h = d // head_dim
    q = clusters @ wq.T
    kv = x @ wkv.T
    q = q.reshape(b, nc, h, head_dim).transpose(0, 2, 1, 3)
    k = kv[..., :d].reshape(b, n, h, head_dim).transpose(0, 2, 1, 3)
    v = kv[..., d:].reshape(b, n, h, head_dim).transpose(0, 2, 1, 3)
    attn = jax.nn.softmax(
        jnp.einsum('bhqd,bhkd->bhqk', q, k) * head_dim ** -0.5, axis=-1)
    o = jnp.einsum('bhqk,bhkd->bhqd', attn, v).transpose(0, 2, 1, 3).reshape(b, nc, d)
    return o @ wo.T


if __name__ == "__main__":
    # small shapes: batch=2, tokens n=16, clusters nc=8, emb_dim=64, head_dim=32
    b, n, nc, d = 2, 16, 8, 64
    key = jax.random.PRNGKey(0)
    kx, kc, kq, kkv, ko = jax.random.split(key, 5)

    x = jax.random.normal(kx, (b, n, d), dtype=jnp.float32)
    clusters = jax.random.normal(kc, (b, nc, d), dtype=jnp.float32)

    # deterministic "Linear" weights (PyTorch convention: W is [out_features, in_features])
    wq = 0.05 * jax.random.normal(kq, (d, d), dtype=jnp.float32)
    wkv = 0.05 * jax.random.normal(kkv, (2 * d, d), dtype=jnp.float32)
    wo = 0.05 * jax.random.normal(ko, (d, d), dtype=jnp.float32)

    # One-time weight prep (hoisted out of the call path, per review).
    params = prepare_attention_aggregate_params(wq, wkv, wo, head_dim=32)

    out, token_sizes = attention_aggregate(x, clusters, params, head_dim=32)
    out = jax.block_until_ready(out)

    ref = _reference(x, clusters, wq, wkv, wo, head_dim=32)
    assert token_sizes is None
    # bf16 MXU inputs + approx softmax reciprocal -> tolerance loosened vs pure f32.
    assert jnp.allclose(out, ref, atol=1e-2, rtol=1e-2), \
        f"max err {jnp.max(jnp.abs(out - ref))}"

    print("KERNEL_OK")
</pallas_src>

<mosaic_0001>
module attributes {stable_mosaic.version = 11 : i64} {
  func.func @_attn_agg_kernel(%arg0: i32, %arg1: memref<2x16x64xbf16, #tpu.memory_space<vmem>>, %arg2: memref<2x8x64xbf16, #tpu.memory_space<vmem>>, %arg3: memref<64x64xbf16, #tpu.memory_space<vmem>>, %arg4: memref<64x128xbf16, #tpu.memory_space<vmem>>, %arg5: memref<2x32x64xbf16, #tpu.memory_space<vmem>>, %arg6: memref<2x8x64xf32, #tpu.memory_space<vmem>>) attributes {dimension_semantics = [#tpu.dimension_semantics<parallel>], iteration_bounds = array<i64: 1>, scalar_prefetch = 0 : i64, scratch_operands = 0 : i64, tpu.core_type = #tpu.core_type<tc>, window_params = [{transform_indices = @transform_0, window_bounds = array<i64: 2, 16, 64>}, {transform_indices = @transform_1, window_bounds = array<i64: 2, 8, 64>}, {pipeline_mode = #tpu.pipeline_mode<synchronous>, transform_indices = @transform_2, window_bounds = array<i64: 64, 64>}, {pipeline_mode = #tpu.pipeline_mode<synchronous>, transform_indices = @transform_3, window_bounds = array<i64: 64, 128>}, {pipeline_mode = #tpu.pipeline_mode<synchronous>, transform_indices = @transform_4, window_bounds = array<i64: 2, 32, 64>}, {transform_indices = @transform_5, window_bounds = array<i64: 2, 8, 64>}]} {
    %c0 = arith.constant 0 : index
    %c0_0 = arith.constant 0 : index
    %c0_1 = arith.constant 0 : index
    %0 = vector.load %arg1[%c0, %c0_0, %c0_1] : memref<2x16x64xbf16, #tpu.memory_space<vmem>>, vector<2x16x64xbf16>
    %1 = vector.shape_cast %0 : vector<2x16x64xbf16> to vector<32x64xbf16>
    %c0_2 = arith.constant 0 : index
    %c0_3 = arith.constant 0 : index
    %c0_4 = arith.constant 0 : index
    %2 = vector.load %arg2[%c0_2, %c0_3, %c0_4] : memref<2x8x64xbf16, #tpu.memory_space<vmem>>, vector<2x8x64xbf16>
    %3 = vector.shape_cast %2 : vector<2x8x64xbf16> to vector<16x64xbf16>
    %c0_5 = arith.constant 0 : index
    %c0_6 = arith.constant 0 : index
    %4 = vector.load %arg3[%c0_5, %c0_6] : memref<64x64xbf16, #tpu.memory_space<vmem>>, vector<64x64xbf16>
    %cst = arith.constant dense<0.000000e+00> : vector<16x64xf32>
    %5 = tpu.matmul %3, %4, %cst {dimension_numbers = #tpu.dot_dimension_numbers<[1], [0], [0], [1], [0, 0, 1, 1], [], []>} : vector<16x64xbf16>, vector<64x64xbf16>, vector<16x64xf32> -> vector<16x64xf32>
    %c0_7 = arith.constant 0 : index
    %c0_8 = arith.constant 0 : index
    %6 = vector.load %arg4[%c0_7, %c0_8] : memref<64x128xbf16, #tpu.memory_space<vmem>>, vector<64x128xbf16>
    %cst_9 = arith.constant dense<0.000000e+00> : vector<32x128xf32>
    %7 = tpu.matmul %1, %6, %cst_9 {dimension_numbers = #tpu.dot_dimension_numbers<[1], [0], [0], [1], [0, 0, 1, 1], [], []>} : vector<32x64xbf16>, vector<64x128xbf16>, vector<32x128xf32> -> vector<32x128xf32>
    %cst_10 = arith.constant 0.176776692 : f32
    %8 = vector.broadcast %cst_10 : f32 to vector<16x64xf32>
    %9 = arith.mulf %5, %8 : vector<16x64xf32>
    %10 = arith.truncf %9 : vector<16x64xf32> to vector<16x64xbf16>
    %11 = vector.shape_cast %10 : vector<16x64xbf16> to vector<2x8x64xbf16>
    %12 = arith.truncf %7 : vector<32x128xf32> to vector<32x128xbf16>
    %13 = vector.shape_cast %12 : vector<32x128xbf16> to vector<2x16x128xbf16>
    %cst_11 = arith.constant 0.000000e+00 : f32
    %14 = vector.broadcast %cst_11 : f32 to vector<16x64xf32>
    %15 = vector.extract_strided_slice %11 {offsets = [0, 0, 0], sizes = [2, 8, 32], strides = [1, 1, 1]} : vector<2x8x64xbf16> to vector<2x8x32xbf16>
    %16 = vector.extract_strided_slice %13 {offsets = [0, 0, 0], sizes = [2, 16, 32], strides = [1, 1, 1]} : vector<2x16x128xbf16> to vector<2x16x32xbf16>
    %17 = vector.extract_strided_slice %13 {offsets = [0, 0, 64], sizes = [2, 16, 32], strides = [1, 1, 1]} : vector<2x16x128xbf16> to vector<2x16x32xbf16>
    "tpu.trace_start"() <{level = 10 : i32, message = "bqe,bke->bqk"}> : () -> ()
    %cst_12 = arith.constant dense<0.000000e+00> : vector<2x8x16xf32>
    %18 = tpu.matmul %15, %16, %cst_12 {dimension_numbers = #tpu.dot_dimension_numbers<[2], [2], [1], [1], [0, 0, 0, 1, 1, 1], [0], [0]>} : vector<2x8x32xbf16>, vector<2x16x32xbf16>, vector<2x8x16xf32> -> vector<2x8x16xf32>
    "tpu.trace_stop"() : () -> ()
    %cst_13 = arith.constant dense<0xFF800000> : vector<2x8xf32>
    %19 = vector.multi_reduction <maximumf>, %18, %cst_13 [2] : vector<2x8x16xf32> to vector<2x8xf32>
    %20 = vector.shape_cast %19 : vector<2x8xf32> to vector<2x8x1xf32>
    %21 = vector.broadcast %20 : vector<2x8x1xf32> to vector<2x8x16xf32>
    %22 = arith.subf %18, %21 : vector<2x8x16xf32>
    %23 = math.exp %22 : vector<2x8x16xf32>
    %cst_14 = arith.constant dense<0.000000e+00> : vector<2x8xf32>
    %24 = vector.multi_reduction <add>, %23, %cst_14 [2] : vector<2x8x16xf32> to vector<2x8xf32>
    %25 = vector.shape_cast %24 : vector<2x8xf32> to vector<2x8x1xf32>
    %26 = tpu.reciprocal %25 {approx = true} : vector<2x8x1xf32> -> vector<2x8x1xf32>
    %27 = vector.broadcast %26 : vector<2x8x1xf32> to vector<2x8x16xf32>
    %28 = arith.mulf %23, %27 : vector<2x8x16xf32>
    %29 = arith.truncf %28 : vector<2x8x16xf32> to vector<2x8x16xbf16>
    "tpu.trace_start"() <{level = 10 : i32, message = "bqk,bke->bqe"}> : () -> ()
    %cst_15 = arith.constant dense<0.000000e+00> : vector<2x8x32xf32>
    %30 = tpu.matmul %29, %17, %cst_15 {dimension_numbers = #tpu.dot_dimension_numbers<[2], [1], [1], [2], [0, 0, 0, 1, 1, 2], [0], [0]>} : vector<2x8x16xbf16>, vector<2x16x32xbf16>, vector<2x8x32xf32> -> vector<2x8x32xf32>
    "tpu.trace_stop"() : () -> ()
    %31 = arith.truncf %30 : vector<2x8x32xf32> to vector<2x8x32xbf16>
    %32 = vector.shape_cast %31 : vector<2x8x32xbf16> to vector<16x32xbf16>
    %c0_16 = arith.constant 0 : index
    %c0_17 = arith.constant 0 : index
    %c0_18 = arith.constant 0 : index
    %33 = vector.load %arg5[%c0_16, %c0_17, %c0_18] : memref<2x32x64xbf16, #tpu.memory_space<vmem>>, vector<1x32x64xbf16>
    %34 = vector.shape_cast %33 : vector<1x32x64xbf16> to vector<32x64xbf16>
    %cst_19 = arith.constant dense<0.000000e+00> : vector<16x64xf32>
    %35 = tpu.matmul %32, %34, %cst_19 {dimension_numbers = #tpu.dot_dimension_numbers<[1], [0], [0], [1], [0, 0, 1, 1], [], []>} : vector<16x32xbf16>, vector<32x64xbf16>, vector<16x64xf32> -> vector<16x64xf32>
    %36 = arith.addf %14, %35 : vector<16x64xf32>
    %37 = vector.extract_strided_slice %11 {offsets = [0, 0, 32], sizes = [2, 8, 32], strides = [1, 1, 1]} : vector<2x8x64xbf16> to vector<2x8x32xbf16>
    %38 = vector.extract_strided_slice %13 {offsets = [0, 0, 32], sizes = [2, 16, 32], strides = [1, 1, 1]} : vector<2x16x128xbf16> to vector<2x16x32xbf16>
    %39 = vector.extract_strided_slice %13 {offsets = [0, 0, 96], sizes = [2, 16, 32], strides = [1, 1, 1]} : vector<2x16x128xbf16> to vector<2x16x32xbf16>
    "tpu.trace_start"() <{level = 10 : i32, message = "bqe,bke->bqk"}> : () -> ()
    %cst_20 = arith.constant dense<0.000000e+00> : vector<2x8x16xf32>
    %40 = tpu.matmul %37, %38, %cst_20 {dimension_numbers = #tpu.dot_dimension_numbers<[2], [2], [1], [1], [0, 0, 0, 1, 1, 1], [0], [0]>} : vector<2x8x32xbf16>, vector<2x16x32xbf16>, vector<2x8x16xf32> -> vector<2x8x16xf32>
    "tpu.trace_stop"() : () -> ()
    %cst_21 = arith.constant dense<0xFF800000> : vector<2x8xf32>
    %41 = vector.multi_reduction <maximumf>, %40, %cst_21 [2] : vector<2x8x16xf32> to vector<2x8xf32>
    %42 = vector.shape_cast %41 : vector<2x8xf32> to vector<2x8x1xf32>
    %43 = vector.broadcast %42 : vector<2x8x1xf32> to vector<2x8x16xf32>
    %44 = arith.subf %40, %43 : vector<2x8x16xf32>
    %45 = math.exp %44 : vector<2x8x16xf32>
    %cst_22 = arith.constant dense<0.000000e+00> : vector<2x8xf32>
    %46 = vector.multi_reduction <add>, %45, %cst_22 [2] : vector<2x8x16xf32> to vector<2x8xf32>
    %47 = vector.shape_cast %46 : vector<2x8xf32> to vector<2x8x1xf32>
    %48 = tpu.reciprocal %47 {approx = true} : vector<2x8x1xf32> -> vector<2x8x1xf32>
    %49 = vector.broadcast %48 : vector<2x8x1xf32> to vector<2x8x16xf32>
    %50 = arith.mulf %45, %49 : vector<2x8x16xf32>
    %51 = arith.truncf %50 : vector<2x8x16xf32> to vector<2x8x16xbf16>
    "tpu.trace_start"() <{level = 10 : i32, message = "bqk,bke->bqe"}> : () -> ()
    %cst_23 = arith.constant dense<0.000000e+00> : vector<2x8x32xf32>
    %52 = tpu.matmul %51, %39, %cst_23 {dimension_numbers = #tpu.dot_dimension_numbers<[2], [1], [1], [2], [0, 0, 0, 1, 1, 2], [0], [0]>} : vector<2x8x16xbf16>, vector<2x16x32xbf16>, vector<2x8x32xf32> -> vector<2x8x32xf32>
    "tpu.trace_stop"() : () -> ()
    %53 = arith.truncf %52 : vector<2x8x32xf32> to vector<2x8x32xbf16>
    %54 = vector.shape_cast %53 : vector<2x8x32xbf16> to vector<16x32xbf16>
    %c1 = arith.constant 1 : index
    %c0_24 = arith.constant 0 : index
    %c0_25 = arith.constant 0 : index
    %55 = vector.load %arg5[%c1, %c0_24, %c0_25] : memref<2x32x64xbf16, #tpu.memory_space<vmem>>, vector<1x32x64xbf16>
    %56 = vector.shape_cast %55 : vector<1x32x64xbf16> to vector<32x64xbf16>
    %cst_26 = arith.constant dense<0.000000e+00> : vector<16x64xf32>
    %57 = tpu.matmul %54, %56, %cst_26 {dimension_numbers = #tpu.dot_dimension_numbers<[1], [0], [0], [1], [0, 0, 1, 1], [], []>} : vector<16x32xbf16>, vector<32x64xbf16>, vector<16x64xf32> -> vector<16x64xf32>
    %58 = arith.addf %36, %57 : vector<16x64xf32>
    %59 = vector.shape_cast %58 : vector<16x64xf32> to vector<2x8x64xf32>
    %c0_27 = arith.constant 0 : index
    %c0_28 = arith.constant 0 : index
    %c0_29 = arith.constant 0 : index
    %60 = vector.load %arg6[%c0_27, %c0_28, %c0_29] : memref<2x8x64xf32, #tpu.memory_space<vmem>>, vector<2x8x64xf32>
    tpu.vector_store %arg6[%c0_27, %c0_28, %c0_29], %59 {strides = array<i32>} : memref<2x8x64xf32, #tpu.memory_space<vmem>>, vector<2x8x64xf32>,
    return
  }
  func.func @transform_0(%arg0: i32) -> (i32, i32, i32) {
    %c0_i32 = arith.constant 0 : i32
    %c0_i32_0 = arith.constant 0 : i32
    %c0_i32_1 = arith.constant 0 : i32
    return %arg0, %c0_i32, %c0_i32_0 : i32, i32, i32
  }
  func.func @transform_1(%arg0: i32) -> (i32, i32, i32) {
    %c0_i32 = arith.constant 0 : i32
    %c0_i32_0 = arith.constant 0 : i32
    %c0_i32_1 = arith.constant 0 : i32
    return %arg0, %c0_i32, %c0_i32_0 : i32, i32, i32
  }
  func.func @transform_2(%arg0: i32) -> (i32, i32) {
    %c0_i32 = arith.constant 0 : i32
    %c0_i32_0 = arith.constant 0 : i32
    %c0_i32_1 = arith.constant 0 : i32
    return %c0_i32, %c0_i32_0 : i32, i32
  }
  func.func @transform_3(%arg0: i32) -> (i32, i32) {
    %c0_i32 = arith.constant 0 : i32
    %c0_i32_0 = arith.constant 0 : i32
    %c0_i32_1 = arith.constant 0 : i32
    return %c0_i32, %c0_i32_0 : i32, i32
  }
  func.func @transform_4(%arg0: i32) -> (i32, i32, i32) {
    %c0_i32 = arith.constant 0 : i32
    %c0_i32_0 = arith.constant 0 : i32
    %c0_i32_1 = arith.constant 0 : i32
    %c0_i32_2 = arith.constant 0 : i32
    return %c0_i32, %c0_i32_0, %c0_i32_1 : i32, i32, i32
  }
  func.func @transform_5(%arg0: i32) -> (i32, i32, i32) {
    %c0_i32 = arith.constant 0 : i32
    %c0_i32_0 = arith.constant 0 : i32
    %c0_i32_1 = arith.constant 0 : i32
    return %arg0, %c0_i32, %c0_i32_0 : i32, i32, i32
  }
}

</mosaic_0001>

<llo_original>
// kernel: tpu_custom_call.1
$region0: #{tpu_custom_call.1}
  #allocation0 [shape = 'u32[]', space=smem, size = 0x4, offset = 0x4, fixed_abs, tag = 'smem constant byte address 0x4 - core index']
  #allocation1 [shape = 'u32[144,128]{1,0:T(1,128)}', space=vmem, size = 0x12000, scoped, tag = 'internal scratch']
  %s0 = inlined_call_operand.hbm [shape: bf16[2,16,64], index: 0, kind: input, shape index: {}]
  %s1 = inlined_call_operand.hbm [shape: bf16[2,8,64], index: 1, kind: input, shape index: {}]
  %s2 = inlined_call_operand.hbm [shape: bf16[64,64], index: 2, kind: input, shape index: {}]
  %s3 = inlined_call_operand.hbm [shape: bf16[64,128], index: 3, kind: input, shape index: {}]
  %s4 = inlined_call_operand.hbm [shape: bf16[2,32,64], index: 4, kind: input, shape index: {}]
  %s5 = inlined_call_operand.hbm [shape: f32[2,8,64], index: 5, kind: output, shape index: {}]
  %s6 = sld [smem:[#allocation0]]
  $region50: #{tpu_custom_call.1} parent=0
    _
  %s8 = ssub.s32 1, %s6
  %s9 = scalar_select 0, %s8, %s6
  $region1: #{tpu_custom_call.1} parent=0
    #allocation2 [shape = 'u8[8192]{0}', space=vmem, size = 0x2000, scoped, tag = 'input window, operand 0, single buffered']
    #allocation3 [shape = 's32[1]{0}', space=sflag, size = 0x4, scoped, tag = 'scoped memory for tpu_custom_call.1']
    #allocation4 [shape = 's32[1]{0}', space=sflag, size = 0x4, scoped, tag = 'scoped memory for tpu_custom_call.1']
    #allocation5 [shape = 'u8[4096]{0}', space=vmem, size = 0x1000, scoped, tag = 'input window, operand 1, single buffered']
    #allocation6 [shape = 's32[1]{0}', space=sflag, size = 0x4, scoped, tag = 'scoped memory for tpu_custom_call.1']
    #allocation7 [shape = 'u8[16384]{0}', space=vmem, size = 0x4000, scoped, tag = 'input window, operand 2, single buffered']
    #allocation8 [shape = 'u8[16384]{0}', space=vmem, size = 0x4000, scoped, tag = 'input window, operand 3, single buffered']
    #allocation9 [shape = 's32[1]{0}', space=sflag, size = 0x4, scoped, tag = 'scoped memory for tpu_custom_call.1']
    #allocation10 [shape = 'u8[16384]{0}', space=vmem, size = 0x4000, scoped, tag = 'input window, operand 4, single buffered']
    #allocation11 [shape = 'u8[8192]{0}', space=vmem, size = 0x2000, scoped, tag = 'output window, operand 0, single buffered']
    %10 = vsyncpa [#allocation3], 0
    %11 = vsyncpa [#allocation6], 0
    %12 = vsyncpa [#allocation9], 0
    %13 = vsyncpa [#allocation4], 0
    // Predicated region
    $region2: #{tpu_custom_call.1} parent=1 // pred_check
      _
    $region3: #{tpu_custom_call.1} parent=1 // pred_check_branch
      %15 = sbr.rel (0) target = $region5
    $region4: #{tpu_custom_call.1} parent=1 // pred_region
      %s17 = ssub.s32 256, 256
      %18 = vsyncadd [#allocation3], %s17
      %s19 = sshll.u32 [#allocation2], 4
      %s20 = int_to_ptr.vmem [resolvable:$true] %s19
      %25 = dma.hbm_to_vmem [thread:$0]  %s0, 256, %s20, [#allocation3], 64, 64, 4
    $region5: #{tpu_custom_call.1} parent=1 // pred_fallthru
      _
    // Predicated region
    $region6: #{tpu_custom_call.1} parent=1 // pred_check
      _
    $region7: #{tpu_custom_call.1} parent=1 // pred_check_branch
      %27 = sbr.rel (0) target = $region9
    $region8: #{tpu_custom_call.1} parent=1 // pred_region
      %s29 = ssub.s32 128, 128
      %30 = vsyncadd [#allocation6], %s29
      %s31 = sshll.u32 [#allocation5], 4
      %s32 = int_to_ptr.vmem [resolvable:$true] %s31
      %37 = dma.hbm_to_vmem [thread:$0]  %s1, 128, %s32, [#allocation6], 64, 64, 4
    $region9: #{tpu_custom_call.1} parent=1 // pred_fallthru
      _
    // Predicated region
    $region10: #{tpu_custom_call.1} parent=1 // pred_check
      _
    $region11: #{tpu_custom_call.1} parent=1 // pred_check_branch
      %39 = sbr.rel (0) target = $region13
    $region12: #{tpu_custom_call.1} parent=1 // pred_region
      %s41 = ssub.s32 512, 512
      %42 = vsyncadd [#allocation6], %s41
      %s43 = sshll.u32 [#allocation7], 4
      %s44 = int_to_ptr.vmem [resolvable:$true] %s43
      %49 = dma.hbm_to_vmem [thread:$0]  %s2, 512, %s44, [#allocation6], 64, 64, 4
    $region13: #{tpu_custom_call.1} parent=1 // pred_fallthru
      _
    // Predicated region
    $region14: #{tpu_custom_call.1} parent=1 // pred_check
      _
    $region15: #{tpu_custom_call.1} parent=1 // pred_check_branch
      %51 = sbr.rel (0) target = $region17
    $region16: #{tpu_custom_call.1} parent=1 // pred_region
      %s53 = ssub.s32 512, 512
      %54 = vsyncadd [#allocation9], %s53
      %s55 = sshll.u32 [#allocation8], 4
      %s56 = int_to_ptr.vmem [resolvable:$true] %s55
      %61 = dma.hbm_to_vmem [thread:$0]  %s3, 512, %s56, [#allocation9], 64, 64, 4
    $region17: #{tpu_custom_call.1} parent=1 // pred_fallthru
      _
    // Predicated region
    $region18: #{tpu_custom_call.1} parent=1 // pred_check
      _
    $region19: #{tpu_custom_call.1} parent=1 // pred_check_branch
      %63 = sbr.rel (0) target = $region21
    $region20: #{tpu_custom_call.1} parent=1 // pred_region
      %s65 = ssub.s32 512, 512
      %66 = vsyncadd [#allocation9], %s65
      %s67 = sshll.u32 [#allocation10], 4
      %s68 = int_to_ptr.vmem [resolvable:$true] %s67
      %73 = dma.hbm_to_vmem [thread:$0]  %s4, 512, %s68, [#allocation9], 64, 64, 4
    $region21: #{tpu_custom_call.1} parent=1 // pred_fallthru
      _
    // Predicated region
    $region22: #{tpu_custom_call.1} parent=1 // pred_check
      _
    $region23: #{tpu_custom_call.1} parent=1 // pred_check_branch
      %75 = sbr.rel (0) target = $region25
    $region24: #{tpu_custom_call.1} parent=1 // pred_region
      %76 = dma.done [#allocation3], 256
    $region25: #{tpu_custom_call.1} parent=1 // pred_fallthru
      _
    // Predicated region
    $region26: #{tpu_custom_call.1} parent=1 // pred_check
      _
    $region27: #{tpu_custom_call.1} parent=1 // pred_check_branch
      %78 = sbr.rel (0) target = $region29
    $region28: #{tpu_custom_call.1} parent=1 // pred_region
      %79 = dma.done [#allocation6], 128
    $region29: #{tpu_custom_call.1} parent=1 // pred_fallthru
      _
    // Predicated region
    $region30: #{tpu_custom_call.1} parent=1 // pred_check
      _
    $region31: #{tpu_custom_call.1} parent=1 // pred_check_branch
      %81 = sbr.rel (0) target = $region33
    $region32: #{tpu_custom_call.1} parent=1 // pred_region
      %82 = dma.done [#allocation6], 512
    $region33: #{tpu_custom_call.1} parent=1 // pred_fallthru
      _
    // Predicated region
    $region34: #{tpu_custom_call.1} parent=1 // pred_check
      _
    $region35: #{tpu_custom_call.1} parent=1 // pred_check_branch
      %84 = sbr.rel (0) target = $region37
    $region36: #{tpu_custom_call.1} parent=1 // pred_region
      %85 = dma.done [#allocation9], 512
    $region37: #{tpu_custom_call.1} parent=1 // pred_fallthru
      _
    // Predicated region
    $region38: #{tpu_custom_call.1} parent=1 // pred_check
      _
    $region39: #{tpu_custom_call.1} parent=1 // pred_check_branch
      %87 = sbr.rel (0) target = $region41
    $region40: #{tpu_custom_call.1} parent=1 // pred_region
      %88 = dma.done [#allocation9], 512
    $region41: #{tpu_custom_call.1} parent=1 // pred_fallthru
      _
    %v90 = vld [vmem:[#allocation2] sm:$0xf]
    %v91 = vld [vmem:[#allocation2 + $0x4] sm:$0xf]
    %v92 = vld [vmem:[#allocation2 + $0x8] sm:$0xf]
    %v93 = vld [vmem:[#allocation2 + $0xc] sm:$0xf]
    %v94 = vld [vmem:[#allocation5] sm:$0xf]
    %v95 = vld [vmem:[#allocation5 + $0x4] sm:$0xf]
    %v96 = vld [vmem:[#allocation7] sm:$0xf]
    %v97 = vld [vmem:[#allocation7 + $0x4] sm:$0xf]
    %v98 = vld [vmem:[#allocation7 + $0x8] sm:$0xf]
    %v99 = vld [vmem:[#allocation7 + $0xc] sm:$0xf]
    %v100 = vld [vmem:[#allocation7 + $0x10] sm:$0xf]
    %v101 = vld [vmem:[#allocation7 + $0x14] sm:$0xf]
    %v102 = vld [vmem:[#allocation7 + $0x18] sm:$0xf]
    %v103 = vld [vmem:[#allocation7 + $0x1c] sm:$0xf]
    %v106 = vunpack.c.l.b16 %v94
    %v107 = vunpack.c.l.b16 %v95
    %v108 = vpack.c.b16 %v107, %v106
    %v117 = vunpack.c.l.b16 %v96
    %v118 = vunpack.c.l.b16 %v97
    %v119 = vunpack.c.l.b16 %v98
    %v120 = vunpack.c.l.b16 %v99
    %v121 = vunpack.c.l.b16 %v100
    %v122 = vunpack.c.l.b16 %v101
    %v123 = vunpack.c.l.b16 %v102
    %v124 = vunpack.c.l.b16 %v103
    %v125 = vpack.c.b16 %v118, %v117
    %v126 = vpack.c.b16 %v120, %v119
    %v127 = vpack.c.b16 %v122, %v121
    %v128 = vpack.c.b16 %v124, %v123
    %vm133 = vcmask 523264
    %v135 = vsel %vm133, %v108, 0
    %137 = vmatprep.subr.bf16.mxu0 0
    %138 = vmatpush1.bf16.msra.mxu0 0
    %139 = vmatprep.subr.bf16.mxu0 0
    %140 = vmatpush1.bf16.msra.mxu0 0
    %141 = vmatprep.subr.bf16.mxu0 0
    %142 = vmatpush1.bf16.msra.mxu0 0
    %143 = vmatprep.subr.bf16.mxu0 0
    %144 = vmatpush1.bf16.msra.mxu0 0
    %145 = vmatprep.subr.bf16.mxu0 0
    %146 = vmatpush1.bf16.msra.mxu0 %v128
    %147 = vmatprep.subr.bf16.mxu0 0
    %148 = vmatpush1.bf16.msra.mxu0 %v127
    %149 = vmatprep.subr.bf16.mxu0 0
    %150 = vmatpush1.bf16.msra.mxu0 %v126
    %151 = vmatprep.subr.bf16.mxu0 0
    %152 = vmatpush1.bf16.msra.mxu0 %v125
    %153 = vmatprep.subr.bf16.mxu0 0
    %154 = vmatpush2.bf16.msra.mxu0 0
    %155 = vmatprep.subr.bf16.mxu0 0
    %156 = vmatpush2.bf16.msra.mxu0 0
    %157 = vmatprep.subr.bf16.mxu0 0
    %158 = vmatpush2.bf16.msra.mxu0 0
    %159 = vmatprep.subr.bf16.mxu0 0
    %160 = vmatpush2.bf16.msra.mxu0 0
    %161 = vmatprep.subr.bf16.mxu0 0
    %162 = vmatpush2.bf16.msra.mxu0 0
    %163 = vmatprep.subr.bf16.mxu0 0
    %164 = vmatpush2.bf16.msra.mxu0 0
    %165 = vmatprep.subr.bf16.mxu0 0
    %166 = vmatpush2.bf16.msra.mxu0 0
    %167 = vmatprep.subr.bf16.mxu0 0
    %168 = vmatpush2.bf16.msra.mxu0 0
    %169 = vmatprep.mubr.bf16.mxu0 0
    %170 = vmatmul.mubr.bf16.gmra.mxu0 %v135
    %v171 = vpop.f32.mrf.mxu0
    %v172 = vadd.f32 0.0, %v171
    %v173 = vpop.f32.mrf.mxu0
    %v174 = vpop.f32.mrf.mxu0
    %v175 = vadd.f32 0.0, %v174
    %v176 = vpop.f32.mrf.mxu0
    %177 = vdwg.mxu0
    %v178 = vld [vmem:[#allocation8] sm:$0xf]
    %v179 = vld [vmem:[#allocation8 + $0x4] sm:$0xf]
    %v180 = vld [vmem:[#allocation8 + $0x8] sm:$0xf]
    %v181 = vld [vmem:[#allocation8 + $0xc] sm:$0xf]
    %v182 = vld [vmem:[#allocation8 + $0x10] sm:$0xf]
    %v183 = vld [vmem:[#allocation8 + $0x14] sm:$0xf]
    %v184 = vld [vmem:[#allocation8 + $0x18] sm:$0xf]
    %v185 = vld [vmem:[#allocation8 + $0x1c] sm:$0xf]
    %v190 = vunpack.c.l.b16 %v90
    %v191 = vunpack.c.l.b16 %v91
    %v192 = vunpack.c.l.b16 %v92
    %v193 = vunpack.c.l.b16 %v93
    %v194 = vpack.c.b16 %v191, %v190
    %v195 = vpack.c.b16 %v193, %v192
    %v204 = vunpack.c.l.b16 %v178
    %v205 = vunpack.c.l.b16 %v179
    %v206 = vunpack.c.l.b16 %v180
    %v207 = vunpack.c.l.b16 %v181
    %v208 = vunpack.c.l.b16 %v182
    %v209 = vunpack.c.l.b16 %v183
    %v210 = vunpack.c.l.b16 %v184
    %v211 = vunpack.c.l.b16 %v185
    %v212 = vpack.c.b16 %v205, %v204
    %v213 = vpack.c.b16 %v207, %v206
    %v214 = vpack.c.b16 %v209, %v208
    %v215 = vpack.c.b16 %v211, %v210
    %v221 = vsel %vm133, %v194, 0
    %v224 = vsel %vm133, %v195, 0
    %226 = vmatprep.subr.bf16.mxu0 0
    %227 = vmatpush1.bf16.msra.mxu0 0
    %228 = vmatprep.subr.bf16.mxu0 0
    %229 = vmatpush1.bf16.msra.mxu0 0
    %230 = vmatprep.subr.bf16.mxu0 0
    %231 = vmatpush1.bf16.msra.mxu0 0
    %232 = vmatprep.subr.bf16.mxu0 0
    %233 = vmatpush1.bf16.msra.mxu0 0
    %234 = vmatprep.subr.bf16.mxu0 0
    %235 = vmatpush1.bf16.msra.mxu0 %v215
    %236 = vmatprep.subr.bf16.mxu0 0
    %237 = vmatpush1.bf16.msra.mxu0 %v214
    %238 = vmatprep.subr.bf16.mxu0 0
    %239 = vmatpush1.bf16.msra.mxu0 %v213
    %240 = vmatprep.subr.bf16.mxu0 0
    %241 = vmatpush1.bf16.msra.mxu0 %v212
    %242 = vmatprep.subr.bf16.mxu0 0
    %243 = vmatpush2.bf16.msra.mxu0 0
    %244 = vmatprep.subr.bf16.mxu0 0
    %245 = vmatpush2.bf16.msra.mxu0 0
    %246 = vmatprep.subr.bf16.mxu0 0
    %247 = vmatpush2.bf16.msra.mxu0 0
    %248 = vmatprep.subr.bf16.mxu0 0
    %249 = vmatpush2.bf16.msra.mxu0 0
    %250 = vmatprep.subr.bf16.mxu0 0
    %251 = vmatpush2.bf16.msra.mxu0 0
    %252 = vmatprep.subr.bf16.mxu0 0
    %253 = vmatpush2.bf16.msra.mxu0 0
    %254 = vmatprep.subr.bf16.mxu0 0
    %255 = vmatpush2.bf16.msra.mxu0 0
    %256 = vmatprep.subr.bf16.mxu0 0
    %257 = vmatpush2.bf16.msra.mxu0 0
    %258 = vmatprep.mubr.bf16.mxu0 0
    %259 = vmatmul.mubr.bf16.gmra.mxu0 %v221
    %v260 = vpop.f32.mrf.mxu0
    %v261 = vadd.f32 0.0, %v260
    %v262 = vpop.f32.mrf.mxu0
    %v263 = vpop.f32.mrf.mxu0
    %v264 = vadd.f32 0.0, %v263
    %v265 = vpop.f32.mrf.mxu0
    %266 = vmatprep.mubr.bf16.mxu0 0
    %267 = vmatmul.mubr.bf16.gmra.mxu0 %v224
    %v268 = vpop.f32.mrf.mxu0
    %v269 = vadd.f32 0.0, %v268
    %v270 = vpop.f32.mrf.mxu0
    %v271 = vpop.f32.mrf.mxu0
    %v272 = vadd.f32 0.0, %v271
    %v273 = vpop.f32.mrf.mxu0
    %274 = vdwg.mxu0
    %v275 = vmul.f32 %v172, 0.17677669
    %v276 = vmul.f32 %v175, 0.17677669
    %v277 = vpack.c.bf16 %v276, %v275
    %v279 = vunpack.c.l.b16 %v277
    %v280 = vunpack.c.h.b16 %v277
    %v281 = vpack.c.b16 %v279, %v279
    %v282 = vpack.c.b16 %v280, %v280
    %v283 = vpack.c.bf16 %v264, %v261
    %v284 = vpack.c.bf16 %v272, %v269
    %vm285 = vcmask 261120
    %v287 = vsel %vm285, %v281, 0
    %v290 = vsel %vm285, %v283, 0
    %292 = vmatprep.subr.bf16.mxu0 0
    %293 = vmatpush1.bf16.xpose.msra.mxu0 0
    %294 = vmatprep.subr.bf16.mxu0 0
    %295 = vmatpush1.bf16.xpose.msra.mxu0 0
    %296 = vmatprep.subr.bf16.mxu0 0
    %297 = vmatpush1.bf16.xpose.msra.mxu0 0
    %298 = vmatprep.subr.bf16.mxu0 0
    %299 = vmatpush1.bf16.xpose.msra.mxu0 0
    %300 = vmatprep.subr.bf16.mxu0 0
    %301 = vmatpush1.bf16.xpose.msra.mxu0 0
    %302 = vmatprep.subr.bf16.mxu0 0
    %303 = vmatpush1.bf16.xpose.msra.mxu0 0
    %304 = vmatprep.subr.bf16.mxu0 0
    %305 = vmatpush1.bf16.xpose.msra.mxu0 0
    %306 = vmatprep.subr.bf16.mxu0 0
    %307 = vmatpush1.bf16.xpose.msra.mxu0 %v290
    %308 = vmatprep.subr.bf16.mxu0 0
    %309 = vmatpush2.bf16.xpose.msra.mxu0 0
    %310 = vmatprep.subr.bf16.mxu0 0
    %311 = vmatpush2.bf16.xpose.msra.mxu0 0
    %312 = vmatprep.subr.bf16.mxu0 0
    %313 = vmatpush2.bf16.xpose.msra.mxu0 0
    %314 = vmatprep.subr.bf16.mxu0 0
    %315 = vmatpush2.bf16.xpose.msra.mxu0 0
    %316 = vmatprep.subr.bf16.mxu0 0
    %317 = vmatpush2.bf16.xpose.msra.mxu0 0
    %318 = vmatprep.subr.bf16.mxu0 0
    %319 = vmatpush2.bf16.xpose.msra.mxu0 0
    %320 = vmatprep.subr.bf16.mxu0 0
    %321 = vmatpush2.bf16.xpose.msra.mxu0 0
    %322 = vmatprep.subr.bf16.mxu0 0
    %323 = vmatpush2.bf16.xpose.msra.mxu0 0
    %324 = vmatprep.mubr.bf16.mxu0 0
    %325 = vmatmul.mubr.bf16.gmra.mxu0 %v287
    %v326 = vpop.f32.mrf.mxu0
    %v327 = vadd.f32 0.0, %v326
    %v328 = vpop.f32.mrf.mxu0
    %v329 = vpop.f32.mrf.mxu0
    %v330 = vpop.f32.mrf.mxu0
    %331 = vdwg.mxu0
    %v333 = vsel %vm285, %v282, 0
    %v336 = vsel %vm285, %v284, 0
    %338 = vmatprep.subr.bf16.mxu0 0
    %339 = vmatpush1.bf16.xpose.msra.mxu0 0
    %340 = vmatprep.subr.bf16.mxu0 0
    %341 = vmatpush1.bf16.xpose.msra.mxu0 0
    %342 = vmatprep.subr.bf16.mxu0 0
    %343 = vmatpush1.bf16.xpose.msra.mxu0 0
    %344 = vmatprep.subr.bf16.mxu0 0
    %345 = vmatpush1.bf16.xpose.msra.mxu0 0
    %346 = vmatprep.subr.bf16.mxu0 0
    %347 = vmatpush1.bf16.xpose.msra.mxu0 0
    %348 = vmatprep.subr.bf16.mxu0 0
    %349 = vmatpush1.bf16.xpose.msra.mxu0 0
    %350 = vmatprep.subr.bf16.mxu0 0
    %351 = vmatpush1.bf16.xpose.msra.mxu0 0
    %352 = vmatprep.subr.bf16.mxu0 0
    %353 = vmatpush1.bf16.xpose.msra.mxu0 %v336
    %354 = vmatprep.subr.bf16.mxu0 0
    %355 = vmatpush2.bf16.xpose.msra.mxu0 0
    %356 = vmatprep.subr.bf16.mxu0 0
    %357 = vmatpush2.bf16.xpose.msra.mxu0 0
    %358 = vmatprep.subr.bf16.mxu0 0
    %359 = vmatpush2.bf16.xpose.msra.mxu0 0
    %360 = vmatprep.subr.bf16.mxu0 0
    %361 = vmatpush2.bf16.xpose.msra.mxu0 0
    %362 = vmatprep.subr.bf16.mxu0 0
    %363 = vmatpush2.bf16.xpose.msra.mxu0 0
    %364 = vmatprep.subr.bf16.mxu0 0
    %365 = vmatpush2.bf16.xpose.msra.mxu0 0
    %366 = vmatprep.subr.bf16.mxu0 0
    %367 = vmatpush2.bf16.xpose.msra.mxu0 0
    %368 = vmatprep.subr.bf16.mxu0 0
    %369 = vmatpush2.bf16.xpose.msra.mxu0 0
    %370 = vmatprep.mubr.bf16.mxu0 0
    %371 = vmatmul.mubr.bf16.gmra.mxu0 %v333
    %v372 = vpop.f32.mrf.mxu0
    %v373 = vadd.f32 0.0, %v372
    %v374 = vpop.f32.mrf.mxu0
    %v375 = vpop.f32.mrf.mxu0
    %v376 = vpop.f32.mrf.mxu0
    %377 = vdwg.mxu0
    %vm378 = vcmask 130048
    %v379 = vsel %vm378, %v327, -inf
    %380 = vmax.xlane.f32.xlu0 %v379
    %v381 = vpop.xlane.xlu0 %380
    %v382 = vsel %vm378, %v373, -inf
    %383 = vmax.xlane.f32.xlu0 %v382
    %v384 = vpop.xlane.xlu0 %383
    %v385 = vsub.f32 %v327, %v381
    %v386 = vsub.f32 %v373, %v384
    %v387 = vmul.f32 %v385, 1.442695
    %v388 = vpow.pop %v387
    %v389 = vmul.f32 %v386, 1.442695
    %v390 = vpow.pop %v389
    %v391 = vsel %vm378, %v388, 0.0
    %392 = vadd.xlane.f32.xlu0 %v391
    %v393 = vpop.xlane.xlu0 %392
    %v394 = vsel %vm378, %v390, 0.0
    %395 = vadd.xlane.f32.xlu0 %v394
    %v396 = vpop.xlane.xlu0 %395
    %v397 = vrcp.pop %v393
    %v398 = vrcp.pop %v396
    %v399 = vmul.f32 %v388, %v397
    %v400 = vmul.f32 %v390, %v398
    %v401 = vpack.c.bf16 %v399, %v399
    %v402 = vpack.c.bf16 %v400, %v400
    %404 = vrot.lane.b32.xlu0 %v283, 64
    %v405 = vpop.permute.xlu0 %404
    %v408 = vsel %vm378, %v401, 0
    %410 = vmatprep.subr.bf16.mxu0 0
    %411 = vmatpush1.bf16.msra.mxu0 0
    %412 = vmatprep.subr.bf16.mxu0 0
    %413 = vmatpush1.bf16.msra.mxu0 0
    %414 = vmatprep.subr.bf16.mxu0 0
    %415 = vmatpush1.bf16.msra.mxu0 0
    %416 = vmatprep.subr.bf16.mxu0 0
    %417 = vmatpush1.bf16.msra.mxu0 0
    %418 = vmatprep.subr.bf16.mxu0 0
    %419 = vmatpush1.bf16.msra.mxu0 0
    %420 = vmatprep.subr.bf16.mxu0 0
    %421 = vmatpush1.bf16.msra.mxu0 0
    %422 = vmatprep.subr.bf16.mxu0 0
    %423 = vmatpush1.bf16.msra.mxu0 0
    %424 = vmatprep.subr.bf16.mxu0 0
    %425 = vmatpush1.bf16.msra.mxu0 %v405
    %426 = vmatprep.subr.bf16.mxu0 0
    %427 = vmatpush2.bf16.msra.mxu0 0
    %428 = vmatprep.subr.bf16.mxu0 0
    %429 = vmatpush2.bf16.msra.mxu0 0
    %430 = vmatprep.subr.bf16.mxu0 0
    %431 = vmatpush2.bf16.msra.mxu0 0
    %432 = vmatprep.subr.bf16.mxu0 0
    %433 = vmatpush2.bf16.msra.mxu0 0
    %434 = vmatprep.subr.bf16.mxu0 0
    %435 = vmatpush2.bf16.msra.mxu0 0
    %436 = vmatprep.subr.bf16.mxu0 0
    %437 = vmatpush2.bf16.msra.mxu0 0
    %438 = vmatprep.subr.bf16.mxu0 0
    %439 = vmatpush2.bf16.msra.mxu0 0
    %440 = vmatprep.subr.bf16.mxu0 0
    %441 = vmatpush2.bf16.msra.mxu0 0
    %442 = vmatprep.mubr.bf16.mxu0 0
    %443 = vmatmul.mubr.bf16.gmra.mxu0 %v408
    %v444 = vpop.f32.mrf.mxu0
    %v445 = vadd.f32 0.0, %v444
    %v446 = vpop.f32.mrf.mxu0
    %v447 = vpop.f32.mrf.mxu0
    %v448 = vpop.f32.mrf.mxu0
    %449 = vdwg.mxu0
    %451 = vrot.lane.b32.xlu0 %v284, 64
    %v452 = vpop.permute.xlu0 %451
    %v455 = vsel %vm378, %v402, 0
    %457 = vmatprep.subr.bf16.mxu0 0
    %458 = vmatpush1.bf16.msra.mxu0 0
    %459 = vmatprep.subr.bf16.mxu0 0
    %460 = vmatpush1.bf16.msra.mxu0 0
    %461 = vmatprep.subr.bf16.mxu0 0
    %462 = vmatpush1.bf16.msra.mxu0 0
    %463 = vmatprep.subr.bf16.mxu0 0
    %464 = vmatpush1.bf16.msra.mxu0 0
    %465 = vmatprep.subr.bf16.mxu0 0
    %466 = vmatpush1.bf16.msra.mxu0 0
    %467 = vmatprep.subr.bf16.mxu0 0
    %468 = vmatpush1.bf16.msra.mxu0 0
    %469 = vmatprep.subr.bf16.mxu0 0
    %470 = vmatpush1.bf16.msra.mxu0 0
    %471 = vmatprep.subr.bf16.mxu0 0
    %472 = vmatpush1.bf16.msra.mxu0 %v452
    %473 = vmatprep.subr.bf16.mxu0 0
    %474 = vmatpush2.bf16.msra.mxu0 0
    %475 = vmatprep.subr.bf16.mxu0 0
    %476 = vmatpush2.bf16.msra.mxu0 0
    %477 = vmatprep.subr.bf16.mxu0 0
    %478 = vmatpush2.bf16.msra.mxu0 0
    %479 = vmatprep.subr.bf16.mxu0 0
    %480 = vmatpush2.bf16.msra.mxu0 0
    %481 = vmatprep.subr.bf16.mxu0 0
    %482 = vmatpush2.bf16.msra.mxu0 0
    %483 = vmatprep.subr.bf16.mxu0 0
    %484 = vmatpush2.bf16.msra.mxu0 0
    %485 = vmatprep.subr.bf16.mxu0 0
    %486 = vmatpush2.bf16.msra.mxu0 0
    %487 = vmatprep.subr.bf16.mxu0 0
    %488 = vmatpush2.bf16.msra.mxu0 0
    %489 = vmatprep.mubr.bf16.mxu0 0
    %490 = vmatmul.mubr.bf16.gmra.mxu0 %v455
    %v491 = vpop.f32.mrf.mxu0
    %v492 = vadd.f32 0.0, %v491
    %v493 = vpop.f32.mrf.mxu0
    %v494 = vpop.f32.mrf.mxu0
    %v495 = vpop.f32.mrf.mxu0
    %496 = vdwg.mxu0
    %v497 = vpack.c.bf16 %v445, %v445
    %v498 = vpack.c.bf16 %v492, %v492
    %v499 = vld [vmem:[#allocation10] sm:$0xf]
    %v500 = vld [vmem:[#allocation10 + $0x4] sm:$0xf]
    %v501 = vld [vmem:[#allocation10 + $0x8] sm:$0xf]
    %v502 = vld [vmem:[#allocation10 + $0xc] sm:$0xf]
    %503 = vrot.lane.b32.xlu0 %v281, 96
    %v504 = vpop.permute.xlu0 %503
    %505 = vrot.lane.b32.xlu0 %v283, 96
    %v506 = vpop.permute.xlu0 %505
    %v508 = vsel %vm285, %v504, 0
    %v511 = vsel %vm285, %v506, 0
    %513 = vmatprep.subr.bf16.mxu0 0
    %514 = vmatpush1.bf16.xpose.msra.mxu0 0
    %515 = vmatprep.subr.bf16.mxu0 0
    %516 = vmatpush1.bf16.xpose.msra.mxu0 0
    %517 = vmatprep.subr.bf16.mxu0 0
    %518 = vmatpush1.bf16.xpose.msra.mxu0 0
    %519 = vmatprep.subr.bf16.mxu0 0
    %520 = vmatpush1.bf16.xpose.msra.mxu0 0
    %521 = vmatprep.subr.bf16.mxu0 0
    %522 = vmatpush1.bf16.xpose.msra.mxu0 0
    %523 = vmatprep.subr.bf16.mxu0 0
    %524 = vmatpush1.bf16.xpose.msra.mxu0 0
    %525 = vmatprep.subr.bf16.mxu0 0
    %526 = vmatpush1.bf16.xpose.msra.mxu0 0
    %527 = vmatprep.subr.bf16.mxu0 0
    %528 = vmatpush1.bf16.xpose.msra.mxu0 %v511
    %529 = vmatprep.subr.bf16.mxu0 0
    %530 = vmatpush2.bf16.xpose.msra.mxu0 0
    %531 = vmatprep.subr.bf16.mxu0 0
    %532 = vmatpush2.bf16.xpose.msra.mxu0 0
    %533 = vmatprep.subr.bf16.mxu0 0
    %534 = vmatpush2.bf16.xpose.msra.mxu0 0
    %535 = vmatprep.subr.bf16.mxu0 0
    %536 = vmatpush2.bf16.xpose.msra.mxu0 0
    %537 = vmatprep.subr.bf16.mxu0 0
    %538 = vmatpush2.bf16.xpose.msra.mxu0 0
    %539 = vmatprep.subr.bf16.mxu0 0
    %540 = vmatpush2.bf16.xpose.msra.mxu0 0
    %541 = vmatprep.subr.bf16.mxu0 0
    %542 = vmatpush2.bf16.xpose.msra.mxu0 0
    %543 = vmatprep.subr.bf16.mxu0 0
    %544 = vmatpush2.bf16.xpose.msra.mxu0 0
    %545 = vmatprep.mubr.bf16.mxu0 0
    %546 = vmatmul.mubr.bf16.gmra.mxu0 %v508
    %v547 = vpop.f32.mrf.mxu0
    %v548 = vadd.f32 0.0, %v547
    %v549 = vpop.f32.mrf.mxu0
    %v550 = vpop.f32.mrf.mxu0
    %v551 = vpop.f32.mrf.mxu0
    %552 = vdwg.mxu0
    %553 = vrot.lane.b32.xlu0 %v282, 96
    %v554 = vpop.permute.xlu0 %553
    %555 = vrot.lane.b32.xlu0 %v284, 96
    %v556 = vpop.permute.xlu0 %555
    %v558 = vsel %vm285, %v554, 0
    %v561 = vsel %vm285, %v556, 0
    %563 = vmatprep.subr.bf16.mxu0 0
    %564 = vmatpush1.bf16.xpose.msra.mxu0 0
    %565 = vmatprep.subr.bf16.mxu0 0
    %566 = vmatpush1.bf16.xpose.msra.mxu0 0
    %567 = vmatprep.subr.bf16.mxu0 0
    %568 = vmatpush1.bf16.xpose.msra.mxu0 0
    %569 = vmatprep.subr.bf16.mxu0 0
    %570 = vmatpush1.bf16.xpose.msra.mxu0 0
    %571 = vmatprep.subr.bf16.mxu0 0
    %572 = vmatpush1.bf16.xpose.msra.mxu0 0
    %573 = vmatprep.subr.bf16.mxu0 0
    %574 = vmatpush1.bf16.xpose.msra.mxu0 0
    %575 = vmatprep.subr.bf16.mxu0 0
    %576 = vmatpush1.bf16.xpose.msra.mxu0 0
    %577 = vmatprep.subr.bf16.mxu0 0
    %578 = vmatpush1.bf16.xpose.msra.mxu0 %v561
    %579 = vmatprep.subr.bf16.mxu0 0
    %580 = vmatpush2.bf16.xpose.msra.mxu0 0
    %581 = vmatprep.subr.bf16.mxu0 0
    %582 = vmatpush2.bf16.xpose.msra.mxu0 0
    %583 = vmatprep.subr.bf16.mxu0 0
    %584 = vmatpush2.bf16.xpose.msra.mxu0 0
    %585 = vmatprep.subr.bf16.mxu0 0
    %586 = vmatpush2.bf16.xpose.msra.mxu0 0
    %587 = vmatprep.subr.bf16.mxu0 0
    %588 = vmatpush2.bf16.xpose.msra.mxu0 0
    %589 = vmatprep.subr.bf16.mxu0 0
    %590 = vmatpush2.bf16.xpose.msra.mxu0 0
    %591 = vmatprep.subr.bf16.mxu0 0
    %592 = vmatpush2.bf16.xpose.msra.mxu0 0
    %593 = vmatprep.subr.bf16.mxu0 0
    %594 = vmatpush2.bf16.xpose.msra.mxu0 0
    %595 = vmatprep.mubr.bf16.mxu0 0
    %596 = vmatmul.mubr.bf16.gmra.mxu0 %v558
    %v597 = vpop.f32.mrf.mxu0
    %v598 = vadd.f32 0.0, %v597
    %v599 = vpop.f32.mrf.mxu0
    %v600 = vpop.f32.mrf.mxu0
    %v601 = vpop.f32.mrf.mxu0
    %602 = vdwg.mxu0
    %v603 = vsel %vm378, %v548, -inf
    %604 = vmax.xlane.f32.xlu0 %v603
    %v605 = vpop.xlane.xlu0 %604
    %v606 = vsel %vm378, %v598, -inf
    %607 = vmax.xlane.f32.xlu0 %v606
    %v608 = vpop.xlane.xlu0 %607
    %v609 = vsub.f32 %v548, %v605
    %v610 = vsub.f32 %v598, %v608
    %v611 = vmul.f32 %v609, 1.442695
    %v612 = vpow.pop %v611
    %v613 = vmul.f32 %v610, 1.442695
    %v614 = vpow.pop %v613
    %v615 = vsel %vm378, %v612, 0.0
    %616 = vadd.xlane.f32.xlu0 %v615
    %v617 = vpop.xlane.xlu0 %616
    %v618 = vsel %vm378, %v614, 0.0
    %619 = vadd.xlane.f32.xlu0 %v618
    %v620 = vpop.xlane.xlu0 %619
    %v621 = vrcp.pop %v617
    %v622 = vrcp.pop %v620
    %v623 = vmul.f32 %v612, %v621
    %v624 = vmul.f32 %v614, %v622
    %v625 = vpack.c.bf16 %v623, %v623
    %v626 = vpack.c.bf16 %v624, %v624
    %627 = vrot.lane.b32.xlu0 %v283, 32
    %v628 = vpop.permute.xlu0 %627
    %v631 = vsel %vm378, %v625, 0
    %633 = vmatprep.subr.bf16.mxu0 0
    %634 = vmatpush1.bf16.msra.mxu0 0
    %635 = vmatprep.subr.bf16.mxu0 0
    %636 = vmatpush1.bf16.msra.mxu0 0
    %637 = vmatprep.subr.bf16.mxu0 0
    %638 = vmatpush1.bf16.msra.mxu0 0
    %639 = vmatprep.subr.bf16.mxu0 0
    %640 = vmatpush1.bf16.msra.mxu0 0
    %641 = vmatprep.subr.bf16.mxu0 0
    %642 = vmatpush1.bf16.msra.mxu0 0
    %643 = vmatprep.subr.bf16.mxu0 0
    %644 = vmatpush1.bf16.msra.mxu0 0
    %645 = vmatprep.subr.bf16.mxu0 0
    %646 = vmatpush1.bf16.msra.mxu0 0
    %647 = vmatprep.subr.bf16.mxu0 0
    %648 = vmatpush1.bf16.msra.mxu0 %v628
    %649 = vmatprep.subr.bf16.mxu0 0
    %650 = vmatpush2.bf16.msra.mxu0 0
    %651 = vmatprep.subr.bf16.mxu0 0
    %652 = vmatpush2.bf16.msra.mxu0 0
    %653 = vmatprep.subr.bf16.mxu0 0
    %654 = vmatpush2.bf16.msra.mxu0 0
    %655 = vmatprep.subr.bf16.mxu0 0
    %656 = vmatpush2.bf16.msra.mxu0 0
    %657 = vmatprep.subr.bf16.mxu0 0
    %658 = vmatpush2.bf16.msra.mxu0 0
    %659 = vmatprep.subr.bf16.mxu0 0
    %660 = vmatpush2.bf16.msra.mxu0 0
    %661 = vmatprep.subr.bf16.mxu0 0
    %662 = vmatpush2.bf16.msra.mxu0 0
    %663 = vmatprep.subr.bf16.mxu0 0
    %664 = vmatpush2.bf16.msra.mxu0 0
    %665 = vmatprep.mubr.bf16.mxu0 0
    %666 = vmatmul.mubr.bf16.gmra.mxu0 %v631
    %v667 = vpop.f32.mrf.mxu0
    %v668 = vadd.f32 0.0, %v667
    %v669 = vpop.f32.mrf.mxu0
    %v670 = vpop.f32.mrf.mxu0
    %v671 = vpop.f32.mrf.mxu0
    %672 = vdwg.mxu0
    %673 = vrot.lane.b32.xlu0 %v284, 32
    %v674 = vpop.permute.xlu0 %673
    %v677 = vsel %vm378, %v626, 0
    %679 = vmatprep.subr.bf16.mxu0 0
    %680 = vmatpush1.bf16.msra.mxu0 0
    %681 = vmatprep.subr.bf16.mxu0 0
    %682 = vmatpush1.bf16.msra.mxu0 0
    %683 = vmatprep.subr.bf16.mxu0 0
    %684 = vmatpush1.bf16.msra.mxu0 0
    %685 = vmatprep.subr.bf16.mxu0 0
    %686 = vmatpush1.bf16.msra.mxu0 0
    %687 = vmatprep.subr.bf16.mxu0 0
    %688 = vmatpush1.bf16.msra.mxu0 0
    %689 = vmatprep.subr.bf16.mxu0 0
    %690 = vmatpush1.bf16.msra.mxu0 0
    %691 = vmatprep.subr.bf16.mxu0 0
    %692 = vmatpush1.bf16.msra.mxu0 0
    %693 = vmatprep.subr.bf16.mxu0 0
    %694 = vmatpush1.bf16.msra.mxu0 %v674
    %695 = vmatprep.subr.bf16.mxu0 0
    %696 = vmatpush2.bf16.msra.mxu0 0
    %697 = vmatprep.subr.bf16.mxu0 0
    %698 = vmatpush2.bf16.msra.mxu0 0
    %699 = vmatprep.subr.bf16.mxu0 0
    %700 = vmatpush2.bf16.msra.mxu0 0
    %701 = vmatprep.subr.bf16.mxu0 0
    %702 = vmatpush2.bf16.msra.mxu0 0
    %703 = vmatprep.subr.bf16.mxu0 0
    %704 = vmatpush2.bf16.msra.mxu0 0
    %705 = vmatprep.subr.bf16.mxu0 0
    %706 = vmatpush2.bf16.msra.mxu0 0
    %707 = vmatprep.subr.bf16.mxu0 0
    %708 = vmatpush2.bf16.msra.mxu0 0
    %709 = vmatprep.subr.bf16.mxu0 0
    %710 = vmatpush2.bf16.msra.mxu0 0
    %711 = vmatprep.mubr.bf16.mxu0 0
    %712 = vmatmul.mubr.bf16.gmra.mxu0 %v677
    %v713 = vpop.f32.mrf.mxu0
    %v714 = vadd.f32 0.0, %v713
    %v715 = vpop.f32.mrf.mxu0
    %v716 = vpop.f32.mrf.mxu0
    %v717 = vpop.f32.mrf.mxu0
    %718 = vdwg.mxu0
    %v719 = vpack.c.bf16 %v668, %v668
    %v720 = vpack.c.bf16 %v714, %v714
    %s721 = scalar_lea.vmem [#allocation10], 16
    %v722 = vld [vmem:[%s721] sm:$0xf]
    %v723 = vld [vmem:[%s721 + $0x4] sm:$0xf]
    %v724 = vld [vmem:[%s721 + $0x8] sm:$0xf]
    %v725 = vld [vmem:[%s721 + $0xc] sm:$0xf]
    %v728 = vunpack.c.l.b16 %v719
    %v729 = vunpack.c.l.b16 %v720
    %v730 = vpack.c.b16 %v729, %v728
    %v735 = vunpack.c.l.b16 %v722
    %v736 = vunpack.c.l.b16 %v723
    %v737 = vunpack.c.l.b16 %v724
    %v738 = vunpack.c.l.b16 %v725
    %v739 = vpack.c.b16 %v736, %v735
    %v740 = vpack.c.b16 %v738, %v737
    %v744 = vsel %vm285, %v730, 0
    %746 = vmatprep.subr.bf16.mxu0 0
    %747 = vmatpush1.bf16.msra.mxu0 0
    %748 = vmatprep.subr.bf16.mxu0 0
    %749 = vmatpush1.bf16.msra.mxu0 0
    %750 = vmatprep.subr.bf16.mxu0 0
    %751 = vmatpush1.bf16.msra.mxu0 0
    %752 = vmatprep.subr.bf16.mxu0 0
    %753 = vmatpush1.bf16.msra.mxu0 0
    %754 = vmatprep.subr.bf16.mxu0 0
    %755 = vmatpush1.bf16.msra.mxu0 0
    %756 = vmatprep.subr.bf16.mxu0 0
    %757 = vmatpush1.bf16.msra.mxu0 0
    %758 = vmatprep.subr.bf16.mxu0 0
    %759 = vmatpush1.bf16.msra.mxu0 %v740
    %760 = vmatprep.subr.bf16.mxu0 0
    %761 = vmatpush1.bf16.msra.mxu0 %v739
    %762 = vmatprep.subr.bf16.mxu0 0
    %763 = vmatpush2.bf16.msra.mxu0 0
    %764 = vmatprep.subr.bf16.mxu0 0
    %765 = vmatpush2.bf16.msra.mxu0 0
    %766 = vmatprep.subr.bf16.mxu0 0
    %767 = vmatpush2.bf16.msra.mxu0 0
    %768 = vmatprep.subr.bf16.mxu0 0
    %769 = vmatpush2.bf16.msra.mxu0 0
    %770 = vmatprep.subr.bf16.mxu0 0
    %771 = vmatpush2.bf16.msra.mxu0 0
    %772 = vmatprep.subr.bf16.mxu0 0
    %773 = vmatpush2.bf16.msra.mxu0 0
    %774 = vmatprep.subr.bf16.mxu0 0
    %775 = vmatpush2.bf16.msra.mxu0 0
    %776 = vmatprep.subr.bf16.mxu0 0
    %777 = vmatpush2.bf16.msra.mxu0 0
    %778 = vmatprep.mubr.bf16.mxu0 0
    %779 = vmatmul.mubr.bf16.gmra.mxu0 %v744
    %v780 = vpop.f32.mrf.mxu0
    %v781 = vadd.f32 0.0, %v780
    %v782 = vpop.f32.mrf.mxu0
    %v783 = vpop.f32.mrf.mxu0
    %v784 = vadd.f32 0.0, %v783
    %v785 = vpop.f32.mrf.mxu0
    %786 = vdwg.mxu0
    %v789 = vunpack.c.l.b16 %v497
    %v790 = vunpack.c.l.b16 %v498
    %v791 = vpack.c.b16 %v790, %v789
    %v796 = vunpack.c.l.b16 %v499
    %v797 = vunpack.c.l.b16 %v500
    %v798 = vunpack.c.l.b16 %v501
    %v799 = vunpack.c.l.b16 %v502
    %v800 = vpack.c.b16 %v797, %v796
    %v801 = vpack.c.b16 %v799, %v798
    %v805 = vsel %vm285, %v791, 0
    %807 = vmatprep.subr.bf16.mxu0 0
    %808 = vmatpush1.bf16.msra.mxu0 0
    %809 = vmatprep.subr.bf16.mxu0 0
    %810 = vmatpush1.bf16.msra.mxu0 0
    %811 = vmatprep.subr.bf16.mxu0 0
    %812 = vmatpush1.bf16.msra.mxu0 0
    %813 = vmatprep.subr.bf16.mxu0 0
    %814 = vmatpush1.bf16.msra.mxu0 0
    %815 = vmatprep.subr.bf16.mxu0 0
    %816 = vmatpush1.bf16.msra.mxu0 0
    %817 = vmatprep.subr.bf16.mxu0 0
    %818 = vmatpush1.bf16.msra.mxu0 0
    %819 = vmatprep.subr.bf16.mxu0 0
    %820 = vmatpush1.bf16.msra.mxu0 %v801
    %821 = vmatprep.subr.bf16.mxu0 0
    %822 = vmatpush1.bf16.msra.mxu0 %v800
    %823 = vmatprep.subr.bf16.mxu0 0
    %824 = vmatpush2.bf16.msra.mxu0 0
    %825 = vmatprep.subr.bf16.mxu0 0
    %826 = vmatpush2.bf16.msra.mxu0 0
    %827 = vmatprep.subr.bf16.mxu0 0
    %828 = vmatpush2.bf16.msra.mxu0 0
    %829 = vmatprep.subr.bf16.mxu0 0
    %830 = vmatpush2.bf16.msra.mxu0 0
    %831 = vmatprep.subr.bf16.mxu0 0
    %832 = vmatpush2.bf16.msra.mxu0 0
    %833 = vmatprep.subr.bf16.mxu0 0
    %834 = vmatpush2.bf16.msra.mxu0 0
    %835 = vmatprep.subr.bf16.mxu0 0
    %836 = vmatpush2.bf16.msra.mxu0 0
    %837 = vmatprep.subr.bf16.mxu0 0
    %838 = vmatpush2.bf16.msra.mxu0 0
    %839 = vmatprep.mubr.bf16.mxu0 0
    %840 = vmatmul.mubr.bf16.gmra.mxu0 %v805
    %v841 = vpop.f32.mrf.mxu0
    %v842 = vadd.f32 %v781, %v841
    %v843 = vpop.f32.mrf.mxu0
    %v844 = vpop.f32.mrf.mxu0
    %v845 = vadd.f32 %v784, %v844
    %v846 = vpop.f32.mrf.mxu0
    %847 = vdwg.mxu0
    %848 = vst.msk [vmem:[#allocation11] sm:$0xff] %vm133, %v842
    %849 = vst.msk [vmem:[#allocation11 + $0x8] sm:$0xff] %vm133, %v845
    // Predicated region
    $region42: #{tpu_custom_call.1} parent=1 // pred_check
      _
    $region43: #{tpu_custom_call.1} parent=1 // pred_check_branch
      %851 = sbr.rel (0) target = $region45
    $region44: #{tpu_custom_call.1} parent=1 // pred_region
      %s853 = ssub.s32 256, 256
      %854 = vsyncadd [#allocation4], %s853
      %s855 = sshll.u32 [#allocation11], 4
      %s856 = int_to_ptr.vmem [resolvable:$true] %s855
      %861 = dma.vmem_to_hbm [thread:$0]  %s856, 256, %s5, [#allocation4], 128, 128, 8
    $region45: #{tpu_custom_call.1} parent=1 // pred_fallthru
      _
    // Predicated region
    $region46: #{tpu_custom_call.1} parent=1 // pred_check
      _
    $region47: #{tpu_custom_call.1} parent=1 // pred_check_branch
      %863 = sbr.rel (0) target = $region49
    $region48: #{tpu_custom_call.1} parent=1 // pred_region
      %864 = dma.done [#allocation4], 256
    $region49: #{tpu_custom_call.1} parent=1 // pred_fallthru
      _
    %865 = vsyncpa [#allocation3], 1
    %866 = vsyncpa [#allocation6], 1
    %867 = vsyncpa [#allocation9], 1
    %868 = vsyncpa [#allocation4], 1

</llo_original>
